<compile_context>
chip_gen: v6e
topology: v6e:2x2x1
jax: 0.10.0
libtpu: 0.0.40
codegen_flags: <defaults>
</compile_context>

<pallas_src>
import jax
import jax.numpy as jnp
from jax.experimental import pallas as pl
from jax.experimental.pallas import tpu as pltpu


def _rope_kernel(inv_freq_ref, rel_cos_ref, rel_sin_ref, cos_ref, sin_ref):
    # cos_ref / sin_ref are (tile_s, half) tiles of the final outputs.
    tile_s = cos_ref.shape[0]

    # Base angle for this tile: only 2*half transcendentals per grid step.
    base_pos = (pl.program_id(0) * tile_s).astype(jnp.float32)      # scalar
    base_ang = inv_freq_ref[...] * base_pos                         # (1, half) f32
    base_cos = jnp.cos(base_ang)
    base_sin = jnp.sin(base_ang)

    rc = rel_cos_ref[...]                                           # (tile_s, half) f32
    rs = rel_sin_ref[...]

    # Angle addition on the VPU (4 mul + 2 add per element):
    #   cos(base + rel) = rc*bc - rs*bs ; sin(base + rel) = rs*bc + rc*bs
    cos_ref[...] = (rc * base_cos - rs * base_sin).astype(cos_ref.dtype)
    sin_ref[...] = (rs * base_cos + rc * base_sin).astype(sin_ref.dtype)


def _round_up(a: int, b: int) -> int:
    return ((a + b - 1) // b) * b


def _cdiv(a: int, b: int) -> int:
    return (a + b - 1) // b


def rotary_positional_embedding(x: jax.Array, dim: int, base: float = 10000.0,
                                seq_len: int | None = None):
    """Returns (cos, sin), each of shape (seq_len, dim // 2), dtype = x.dtype."""
    if seq_len is None:
        seq_len = x.shape[-2]
    half = dim // 2
    dtype = x.dtype

    # inv_freq = 1 / base ** (arange(0, dim, 2) / dim) -- deterministic "buffer".
    inv_freq = 1.0 / (base ** (jnp.arange(0, dim, 2, dtype=jnp.float32) / dim))
    inv_freq = inv_freq.reshape(1, half)

    # Sublane alignment: 8 rows for 32-bit outputs, 16 for bf16/f16 packed rows.
    align = 8 if jnp.dtype(dtype).itemsize >= 4 else 16

    # Tile selection: ~1 MiB of f32 per (tile_s, half) slab.  With two outputs
    # and two resident rel tables (double-buffered worst case) this stays well
    # inside the 32 MiB scoped-VMEM default on v5e/v6e/v7x.
    bytes_per_row = max(half, 1) * 4
    target_rows = max(64, min(4096, (1 << 20) // bytes_per_row))
    target_rows = _round_up(target_rows, align)

    if seq_len <= target_rows:
        if seq_len >= 512:
            # Keep >= 2 grid steps: v7x 2-TC sharding + writeback overlap.
            tile_s = _round_up(_cdiv(seq_len, 2), align)
        else:
            tile_s = _round_up(max(seq_len, 1), align)
    else:
        tile_s = target_rows

    grid = (_cdiv(seq_len, tile_s),)

    # Per-tile relative-angle table, computed once in the wrapper (f32).
    rel = jnp.arange(tile_s, dtype=jnp.float32).reshape(tile_s, 1) * inv_freq
    rel_cos = jnp.cos(rel)
    rel_sin = jnp.sin(rel)

    out_bytes = 2 * seq_len * half * jnp.dtype(dtype).itemsize
    in_bytes = (2 * tile_s * half + half) * 4
    cost = pl.CostEstimate(
        flops=6 * seq_len * half,
        transcendentals=2 * half * grid[0],
        bytes_accessed=out_bytes + in_bytes,
    )

    def _const_spec(shape):
        return pl.BlockSpec(shape, lambda i: (0, 0))

    cos, sin = pl.pallas_call(
        _rope_kernel,
        out_shape=(jax.ShapeDtypeStruct((seq_len, half), dtype),
                   jax.ShapeDtypeStruct((seq_len, half), dtype)),
        grid_spec=pltpu.PrefetchScalarGridSpec(
            num_scalar_prefetch=0,
            grid=grid,
            in_specs=[
                _const_spec((1, half)),          # inv_freq
                _const_spec((tile_s, half)),     # rel_cos (resident)
                _const_spec((tile_s, half)),     # rel_sin (resident)
            ],
            out_specs=(
                pl.BlockSpec((tile_s, half), lambda i: (i, 0)),
                pl.BlockSpec((tile_s, half), lambda i: (i, 0)),
            ),
        ),
        compiler_params=pltpu.CompilerParams(
            dimension_semantics=("parallel",)),
        cost_estimate=cost,
    )(inv_freq, rel_cos, rel_sin)

    return cos, sin


def _reference(x, dim, base=10000.0, seq_len=None):
    if seq_len is None:
        seq_len = x.shape[-2]
    inv_freq = 1.0 / (base ** (jnp.arange(0, dim, 2, dtype=jnp.float32) / dim))
    t = jnp.arange(seq_len, dtype=x.dtype)
    freqs = jnp.outer(t, inv_freq).astype(x.dtype)
    return jnp.cos(freqs), jnp.sin(freqs)


if __name__ == "__main__":
    key = jax.random.PRNGKey(0)

    # Primary small-shape test (matches the module's forward contract).
    batch, seq, dim = 2, 8, 32
    x = jax.random.normal(key, (batch, seq, dim), dtype=jnp.float32)

    cos, sin = rotary_positional_embedding(x, dim)
    cos, sin = jax.block_until_ready((cos, sin))

    cos_ref, sin_ref = _reference(x, dim)
    assert cos.shape == (seq, dim // 2) and sin.shape == (seq, dim // 2)
    assert cos.dtype == x.dtype and sin.dtype == x.dtype
    assert jnp.allclose(cos, cos_ref, atol=1e-5, rtol=1e-5)
    assert jnp.allclose(sin, sin_ref, atol=1e-5, rtol=1e-5)

    # Secondary check: multi-tile grid with a ragged last block.
    # Looser tolerance: at |angle| ~ 1e3 the f32 angle-splitting contributes
    # ~theta * 2^-24 ~ 1e-4 absolute error (shared-precision regime; the
    # reference has the same order of absolute angle error).
    seq2, dim2 = 1000, 128
    x2 = jax.random.normal(jax.random.PRNGKey(0), (1, seq2, dim2), dtype=jnp.float32)
    cos2, sin2 = rotary_positional_embedding(x2, dim2)
    cos2, sin2 = jax.block_until_ready((cos2, sin2))
    cos2_ref, sin2_ref = _reference(x2, dim2)
    assert cos2.shape == (seq2, dim2 // 2) and sin2.shape == (seq2, dim2 // 2)
    assert jnp.allclose(cos2, cos2_ref, atol=1e-3, rtol=1e-3)
    assert jnp.allclose(sin2, sin2_ref, atol=1e-3, rtol=1e-3)

    print("KERNEL_OK")
</pallas_src>

<mosaic_0001>
module attributes {stable_mosaic.version = 11 : i64} {
  func.func @_rope_kernel(%arg0: i32, %arg1: memref<1x16xf32, #tpu.memory_space<vmem>>, %arg2: memref<8x16xf32, #tpu.memory_space<vmem>>, %arg3: memref<8x16xf32, #tpu.memory_space<vmem>>, %arg4: memref<8x16xf32, #tpu.memory_space<vmem>>, %arg5: memref<8x16xf32, #tpu.memory_space<vmem>>) attributes {dimension_semantics = [#tpu.dimension_semantics<parallel>], iteration_bounds = array<i64: 1>, scalar_prefetch = 0 : i64, scratch_operands = 0 : i64, tpu.core_type = #tpu.core_type<tc>, window_params = [{pipeline_mode = #tpu.pipeline_mode<synchronous>, transform_indices = @transform_0, window_bounds = array<i64: 1, 16>}, {pipeline_mode = #tpu.pipeline_mode<synchronous>, transform_indices = @transform_1, window_bounds = array<i64: 8, 16>}, {pipeline_mode = #tpu.pipeline_mode<synchronous>, transform_indices = @transform_2, window_bounds = array<i64: 8, 16>}, {transform_indices = @transform_3, window_bounds = array<i64: 8, 16>}, {transform_indices = @transform_4, window_bounds = array<i64: 8, 16>}]} {
    %c8_i32 = arith.constant 8 : i32
    %0 = arith.muli %arg0, %c8_i32 : i32
    %1 = arith.sitofp %0 : i32 to f32
    %c0 = arith.constant 0 : index
    %c0_0 = arith.constant 0 : index
    %2 = vector.load %arg1[%c0, %c0_0] : memref<1x16xf32, #tpu.memory_space<vmem>>, vector<1x16xf32>
    %3 = vector.broadcast %1 : f32 to vector<1x16xf32>
    %4 = arith.mulf %2, %3 : vector<1x16xf32>
    %5 = math.cos %4 : vector<1x16xf32>
    %6 = math.sin %4 : vector<1x16xf32>
    %c0_1 = arith.constant 0 : index
    %c0_2 = arith.constant 0 : index
    %7 = vector.load %arg2[%c0_1, %c0_2] : memref<8x16xf32, #tpu.memory_space<vmem>>, vector<8x16xf32>
    %c0_3 = arith.constant 0 : index
    %c0_4 = arith.constant 0 : index
    %8 = vector.load %arg3[%c0_3, %c0_4] : memref<8x16xf32, #tpu.memory_space<vmem>>, vector<8x16xf32>
    %9 = vector.broadcast %5 : vector<1x16xf32> to vector<8x16xf32>
    %10 = arith.mulf %7, %9 : vector<8x16xf32>
    %11 = vector.broadcast %6 : vector<1x16xf32> to vector<8x16xf32>
    %12 = arith.mulf %8, %11 : vector<8x16xf32>
    %13 = arith.subf %10, %12 : vector<8x16xf32>
    %c0_5 = arith.constant 0 : index
    %c0_6 = arith.constant 0 : index
    %14 = vector.load %arg4[%c0_5, %c0_6] : memref<8x16xf32, #tpu.memory_space<vmem>>, vector<8x16xf32>
    tpu.vector_store %arg4[%c0_5, %c0_6], %13 {strides = array<i32>} : memref<8x16xf32, #tpu.memory_space<vmem>>, vector<8x16xf32>,
    %15 = vector.broadcast %5 : vector<1x16xf32> to vector<8x16xf32>
    %16 = arith.mulf %8, %15 : vector<8x16xf32>
    %17 = vector.broadcast %6 : vector<1x16xf32> to vector<8x16xf32>
    %18 = arith.mulf %7, %17 : vector<8x16xf32>
    %19 = arith.addf %16, %18 : vector<8x16xf32>
    %c0_7 = arith.constant 0 : index
    %c0_8 = arith.constant 0 : index
    %20 = vector.load %arg5[%c0_7, %c0_8] : memref<8x16xf32, #tpu.memory_space<vmem>>, vector<8x16xf32>
    tpu.vector_store %arg5[%c0_7, %c0_8], %19 {strides = array<i32>} : memref<8x16xf32, #tpu.memory_space<vmem>>, vector<8x16xf32>,
    return
  }
  func.func @transform_0(%arg0: i32) -> (i32, i32) {
    %c0_i32 = arith.constant 0 : i32
    %c0_i32_0 = arith.constant 0 : i32
    %c0_i32_1 = arith.constant 0 : i32
    return %c0_i32, %c0_i32_0 : i32, i32
  }
  func.func @transform_1(%arg0: i32) -> (i32, i32) {
    %c0_i32 = arith.constant 0 : i32
    %c0_i32_0 = arith.constant 0 : i32
    %c0_i32_1 = arith.constant 0 : i32
    return %c0_i32, %c0_i32_0 : i32, i32
  }
  func.func @transform_2(%arg0: i32) -> (i32, i32) {
    %c0_i32 = arith.constant 0 : i32
    %c0_i32_0 = arith.constant 0 : i32
    %c0_i32_1 = arith.constant 0 : i32
    return %c0_i32, %c0_i32_0 : i32, i32
  }
  func.func @transform_3(%arg0: i32) -> (i32, i32) {
    %c0_i32 = arith.constant 0 : i32
    %c0_i32_0 = arith.constant 0 : i32
    return %arg0, %c0_i32 : i32, i32
  }
  func.func @transform_4(%arg0: i32) -> (i32, i32) {
    %c0_i32 = arith.constant 0 : i32
    %c0_i32_0 = arith.constant 0 : i32
    return %arg0, %c0_i32 : i32, i32
  }
}

</mosaic_0001>

<llo_original>
// kernel: tpu_custom_call.1
$region0: #{tpu_custom_call.1}
  #allocation0 [shape = 'u32[]', space=smem, size = 0x4, offset = 0x4, fixed_abs, tag = 'smem constant byte address 0x4 - core index']
  #allocation1 [shape = 'u32[144,128]{1,0:T(1,128)}', space=vmem, size = 0x12000, scoped, tag = 'internal scratch']
  %s0 = inlined_call_operand.hbm [shape: f32[1,16], index: 0, kind: input, shape index: {}]
  %s1 = inlined_call_operand.hbm [shape: f32[8,16], index: 1, kind: input, shape index: {}]
  %s2 = inlined_call_operand.hbm [shape: f32[8,16], index: 2, kind: input, shape index: {}]
  %s3 = inlined_call_operand.hbm [shape: f32[8,16], index: 3, kind: output, shape index: {0}]
  %s4 = inlined_call_operand.hbm [shape: f32[8,16], index: 4, kind: output, shape index: {1}]
  %5 = xla_tuple %s3, %s4
  %s6 = sld [smem:[#allocation0]]
  $region42: #{tpu_custom_call.1} parent=0
    _
  %s8 = ssub.s32 1, %s6
  %s9 = scalar_select 0, %s8, %s6
  $region1: #{tpu_custom_call.1} parent=0
    #allocation2 [shape = 'u8[512]{0}', space=vmem, size = 0x400, scoped, tag = 'input window, operand 0, single buffered']
    #allocation3 [shape = 's32[1]{0}', space=sflag, size = 0x4, scoped, tag = 'scoped memory for tpu_custom_call.1']
    #allocation4 [shape = 's32[1]{0}', space=sflag, size = 0x4, scoped, tag = 'scoped memory for tpu_custom_call.1']
    #allocation5 [shape = 'u8[4096]{0}', space=vmem, size = 0x1000, scoped, tag = 'input window, operand 1, single buffered']
    #allocation6 [shape = 's32[1]{0}', space=sflag, size = 0x4, scoped, tag = 'scoped memory for tpu_custom_call.1']
    #allocation7 [shape = 'u8[4096]{0}', space=vmem, size = 0x1000, scoped, tag = 'input window, operand 2, single buffered']
    #allocation8 [shape = 'u8[4096]{0}', space=vmem, size = 0x1000, scoped, tag = 'output window, operand 0, single buffered']
    #allocation9 [shape = 'u8[4096]{0}', space=vmem, size = 0x1000, scoped, tag = 'output window, operand 1, single buffered']
    #allocation10 [shape = 's32[1]{0}', space=sflag, size = 0x4, scoped, tag = 'scoped memory for tpu_custom_call.1']
    %10 = vsyncpa [#allocation3], 0
    %11 = vsyncpa [#allocation6], 0
    %12 = vsyncpa [#allocation4], 0
    %13 = vsyncpa [#allocation10], 0
    // Predicated region
    $region2: #{tpu_custom_call.1} parent=1 // pred_check
      _
    $region3: #{tpu_custom_call.1} parent=1 // pred_check_branch
      %15 = sbr.rel (0) target = $region5
    $region4: #{tpu_custom_call.1} parent=1 // pred_region
      %s17 = ssub.s32 16, 16
      %18 = vsyncadd [#allocation3], %s17
      %s20 = sshll.u32 [#allocation2], 4
      %s21 = int_to_ptr.vmem [resolvable:$true] %s20
      %23 = dma.hbm_to_vmem [thread:$0]  %s0, 16, %s21, [#allocation3]
    $region5: #{tpu_custom_call.1} parent=1 // pred_fallthru
      _
    // Predicated region
    $region6: #{tpu_custom_call.1} parent=1 // pred_check
      _
    $region7: #{tpu_custom_call.1} parent=1 // pred_check_branch
      %25 = sbr.rel (0) target = $region9
    $region8: #{tpu_custom_call.1} parent=1 // pred_region
      %s27 = ssub.s32 128, 128
      %28 = vsyncadd [#allocation6], %s27
      %s30 = sshll.u32 [#allocation5], 4
      %s31 = int_to_ptr.vmem [resolvable:$true] %s30
      %33 = dma.hbm_to_vmem [thread:$0]  %s1, 128, %s31, [#allocation6]
    $region9: #{tpu_custom_call.1} parent=1 // pred_fallthru
      _
    // Predicated region
    $region10: #{tpu_custom_call.1} parent=1 // pred_check
      _
    $region11: #{tpu_custom_call.1} parent=1 // pred_check_branch
      %35 = sbr.rel (0) target = $region13
    $region12: #{tpu_custom_call.1} parent=1 // pred_region
      %s37 = ssub.s32 128, 128
      %38 = vsyncadd [#allocation6], %s37
      %s40 = sshll.u32 [#allocation7], 4
      %s41 = int_to_ptr.vmem [resolvable:$true] %s40
      %43 = dma.hbm_to_vmem [thread:$0]  %s2, 128, %s41, [#allocation6]
    $region13: #{tpu_custom_call.1} parent=1 // pred_fallthru
      _
    // Predicated region
    $region14: #{tpu_custom_call.1} parent=1 // pred_check
      _
    $region15: #{tpu_custom_call.1} parent=1 // pred_check_branch
      %45 = sbr.rel (0) target = $region17
    $region16: #{tpu_custom_call.1} parent=1 // pred_region
      %46 = dma.done [#allocation3], 16
    $region17: #{tpu_custom_call.1} parent=1 // pred_fallthru
      _
    // Predicated region
    $region18: #{tpu_custom_call.1} parent=1 // pred_check
      _
    $region19: #{tpu_custom_call.1} parent=1 // pred_check_branch
      %48 = sbr.rel (0) target = $region21
    $region20: #{tpu_custom_call.1} parent=1 // pred_region
      %49 = dma.done [#allocation6], 128
    $region21: #{tpu_custom_call.1} parent=1 // pred_fallthru
      _
    // Predicated region
    $region22: #{tpu_custom_call.1} parent=1 // pred_check
      _
    $region23: #{tpu_custom_call.1} parent=1 // pred_check_branch
      %51 = sbr.rel (0) target = $region25
    $region24: #{tpu_custom_call.1} parent=1 // pred_region
      %52 = dma.done [#allocation6], 128
    $region25: #{tpu_custom_call.1} parent=1 // pred_fallthru
      _
    %s53 = smul.u32 0, 8
    %s54 = scvt.s32.f32 %s53
    %v55 = vld [vmem:[#allocation2] sm:$0x1]
    %v56 = vstv %s54
    %v57 = vmul.f32 %v55, %v56
    %v58 = vand.u32 2147483647, %v57
    %vm59 = vcmp.le.f32.partialorder %v58, 0.7853982
    %vm60 = vcmp.lt.s32.totalorder %v57, 0
    %v61 = vand.u32 %v57, 2139095040
    %v62 = vshrl.u32 %v61, 23
    %v63 = vsub.s32 %v62, 127
    %v64 = vand.u32 2147483647, %v57
    %v65 = vand.u32 %v64, 8388607
    %v66 = vor.u32 %v65, 8388608
    %v67 = vsub.s32 0, %v66
    %v68 = vadd.s32 %v63, 1
    %vm69 = vcmp.gt.s32.totalorder %v68, 0
    %v70 = vsel %vm69, %v68, 0
    %v71 = vshrl.u32 %v70, 5
    %v72 = vand.u32 %v70, 31
    %v73 = vsub.s32 32, %v72
    %v74 = vshrl.u32 683565275, %v73
    %v75 = vshll.u32 683565275, %v72
    %v76 = vshrl.u32 2475754826, %v73
    %v77 = vor.u32 %v75, %v76
    %v78 = vshll.u32 2475754826, %v72
    %v79 = vshrl.u32 2131351028, %v73
    %v80 = vor.u32 %v78, %v79
    %v81 = vshll.u32 2131351028, %v72
    %v82 = vshrl.u32 2102212464, %v73
    %v83 = vor.u32 %v81, %v82
    %v84 = vshll.u32 2102212464, %v72
    %v85 = vshrl.u32 920167782, %v73
    %v86 = vor.u32 %v84, %v85
    %v87 = vshll.u32 920167782, %v72
    %v88 = vshrl.u32 1326507024, %v73
    %v89 = vor.u32 %v87, %v88
    %vm90 = vcmp.lt.s32.totalorder %v71, 1
    %vm91 = vcmp.lt.s32.totalorder %v71, 2
    %vm92 = vcmp.lt.s32.totalorder %v71, 3
    %vm93 = vcmp.lt.s32.totalorder %v71, 4
    %v94 = vsel %vm90, %v74, %v77
    %v95 = vsel %vm93, %v83, 2102212464
    %v96 = vsel %vm92, %v80, %v95
    %v97 = vsel %vm91, %v94, %v96
    %v98 = vsel %vm90, %v77, %v80
    %v99 = vsel %vm93, %v86, 920167782
    %v100 = vsel %vm92, %v83, %v99
    %v101 = vsel %vm91, %v98, %v100
    %v102 = vsel %vm90, %v80, %v83
    %v103 = vsel %vm93, %v89, 1326507024
    %v104 = vsel %vm92, %v86, %v103
    %v105 = vsel %vm91, %v102, %v104
    %v106 = vshll.u32 %v66, 8
    %v107 = vmul.u32.u64.compose %v106, %v105
    %v108 = vextract.low.u32 %v107
    %v109 = vextract.high.u32 %v107
    %v110 = vmul.u32.u64.compose %v106, %v101
    %v111 = vextract.low.u32 %v110
    %v112 = vextract.high.u32 %v110
    %v113 = vmul.u32 %v106, %v97
    %v114 = vadd.s32 %v109, %v111
    %vm115 = vc.u32 %v109, %v111
    %v116 = vadd.s32 %v112, 1
    %v117 = vsel %vm115, %v116, %v112
    %v118 = vadd.s32 %v113, %v117
    %v119 = vadd.s32 %v118, 536870912
    %v120 = vshrl.u32 %v119, 30
    %v121 = vshll.u32 %v120, 30
    %v122 = vsub.s32 %v118, %v121
    %vm123 = vcmp.lt.s32.totalorder %v122, 0
    %v124 = vsub.s32 0, %v122
    %v125 = vsel %vm123, %v124, %v122
    %v126 = vclz %v125
    %v127 = vsub.s32 %v126, 2
    %vm128 = vcmp.gt.s32.totalorder 0, %v127
    %v129 = vsel %vm128, 0, %v127
    %v130 = vsub.s32 32, %v129
    %v131 = vshll.u32 %v122, %v129
    %v132 = vshrl.u32 %v114, %v130
    %v133 = vor.u32 %v131, %v132
    %v134 = vsub.s32 4294967266, %v129
    %v135 = vadd.s32 %v134, 127
    %v136 = vshll.u32 %v135, 23
    %v137 = vor.u32 4788187, %v136
    %v138 = vand.u32 2147483647, %v137
    %v140 = vcvt.s32.f32 %v133
    %v141 = vmul.f32 %v140, %v138
    %v142 = vxor.u32 %v141, 2147483648
    %v143 = vsel %vm60, %v142, %v141
    %v144 = vsub.s32 4, %v120
    %v145 = vsel %vm60, %v144, %v120
    %v146 = vsel %vm59, %v57, %v143
    %v147 = vsel %vm59, 0, %v145
    %v148 = vcosq.f32.pop %v146
    %v149 = vsinq.f32.pop %v146
    %vm150 = vweird.f32 %v57
    %v151 = vand.u32 %v147, 3
    %vm152 = vcmp.lt.s32.totalorder %v151, 2
    %vm153 = vcmp.eq.s32.totalorder %v151, 0
    %v154 = vxor.u32 %v149, 2147483648
    %v155 = vsel %vm153, %v148, %v154
    %vm156 = vcmp.eq.s32.totalorder %v151, 2
    %v157 = vxor.u32 %v148, 2147483648
    %v158 = vsel %vm156, %v157, %v149
    %v159 = vsel %vm152, %v155, %v158
    %v160 = vsel %vm150, nan, %v159
    %v161 = vand.u32 2147483647, %v57
    %vm162 = vcmp.le.f32.partialorder %v161, 0.7853982
    %vm163 = vcmp.lt.s32.totalorder %v57, 0
    %v164 = vand.u32 %v57, 2139095040
    %v165 = vshrl.u32 %v164, 23
    %v166 = vsub.s32 %v165, 127
    %v167 = vand.u32 2147483647, %v57
    %v168 = vand.u32 %v167, 8388607
    %v169 = vor.u32 %v168, 8388608
    %v170 = vsub.s32 0, %v169
    %v171 = vadd.s32 %v166, 1
    %vm172 = vcmp.gt.s32.totalorder %v171, 0
    %v173 = vsel %vm172, %v171, 0
    %v174 = vshrl.u32 %v173, 5
    %v175 = vand.u32 %v173, 31
    %v176 = vsub.s32 32, %v175
    %v177 = vshrl.u32 683565275, %v176
    %v178 = vshll.u32 683565275, %v175
    %v179 = vshrl.u32 2475754826, %v176
    %v180 = vor.u32 %v178, %v179
    %v181 = vshll.u32 2475754826, %v175
    %v182 = vshrl.u32 2131351028, %v176
    %v183 = vor.u32 %v181, %v182
    %v184 = vshll.u32 2131351028, %v175
    %v185 = vshrl.u32 2102212464, %v176
    %v186 = vor.u32 %v184, %v185
    %v187 = vshll.u32 2102212464, %v175
    %v188 = vshrl.u32 920167782, %v176
    %v189 = vor.u32 %v187, %v188
    %v190 = vshll.u32 920167782, %v175
    %v191 = vshrl.u32 1326507024, %v176
    %v192 = vor.u32 %v190, %v191
    %vm193 = vcmp.lt.s32.totalorder %v174, 1
    %vm194 = vcmp.lt.s32.totalorder %v174, 2
    %vm195 = vcmp.lt.s32.totalorder %v174, 3
    %vm196 = vcmp.lt.s32.totalorder %v174, 4
    %v197 = vsel %vm193, %v177, %v180
    %v198 = vsel %vm196, %v186, 2102212464
    %v199 = vsel %vm195, %v183, %v198
    %v200 = vsel %vm194, %v197, %v199
    %v201 = vsel %vm193, %v180, %v183
    %v202 = vsel %vm196, %v189, 920167782
    %v203 = vsel %vm195, %v186, %v202
    %v204 = vsel %vm194, %v201, %v203
    %v205 = vsel %vm193, %v183, %v186
    %v206 = vsel %vm196, %v192, 1326507024
    %v207 = vsel %vm195, %v189, %v206
    %v208 = vsel %vm194, %v205, %v207
    %v209 = vshll.u32 %v169, 8
    %v210 = vmul.u32.u64.compose %v209, %v208
    %v211 = vextract.low.u32 %v210
    %v212 = vextract.high.u32 %v210
    %v213 = vmul.u32.u64.compose %v209, %v204
    %v214 = vextract.low.u32 %v213
    %v215 = vextract.high.u32 %v213
    %v216 = vmul.u32 %v209, %v200
    %v217 = vadd.s32 %v212, %v214
    %vm218 = vc.u32 %v212, %v214
    %v219 = vadd.s32 %v215, 1
    %v220 = vsel %vm218, %v219, %v215
    %v221 = vadd.s32 %v216, %v220
    %v222 = vadd.s32 %v221, 536870912
    %v223 = vshrl.u32 %v222, 30
    %v224 = vshll.u32 %v223, 30
    %v225 = vsub.s32 %v221, %v224
    %vm226 = vcmp.lt.s32.totalorder %v225, 0
    %v227 = vsub.s32 0, %v225
    %v228 = vsel %vm226, %v227, %v225
    %v229 = vclz %v228
    %v230 = vsub.s32 %v229, 2
    %vm231 = vcmp.gt.s32.totalorder 0, %v230
    %v232 = vsel %vm231, 0, %v230
    %v233 = vsub.s32 32, %v232
    %v234 = vshll.u32 %v225, %v232
    %v235 = vshrl.u32 %v217, %v233
    %v236 = vor.u32 %v234, %v235
    %v237 = vsub.s32 4294967266, %v232
    %v238 = vadd.s32 %v237, 127
    %v239 = vshll.u32 %v238, 23
    %v240 = vor.u32 4788187, %v239
    %v241 = vand.u32 2147483647, %v240
    %v243 = vcvt.s32.f32 %v236
    %v244 = vmul.f32 %v243, %v241
    %v245 = vxor.u32 %v244, 2147483648
    %v246 = vsel %vm163, %v245, %v244
    %v247 = vsub.s32 4, %v223
    %v248 = vsel %vm163, %v247, %v223
    %v249 = vsel %vm162, %v57, %v246
    %v250 = vsel %vm162, 0, %v248
    %v251 = vcosq.f32.pop %v249
    %v252 = vsinq.f32.pop %v249
    %vm253 = vweird.f32 %v57
    %v254 = vadd.s32 %v250, 3
    %v255 = vand.u32 %v254, 3
    %vm256 = vcmp.lt.s32.totalorder %v255, 2
    %vm257 = vcmp.eq.s32.totalorder %v255, 0
    %v258 = vxor.u32 %v252, 2147483648
    %v259 = vsel %vm257, %v251, %v258
    %vm260 = vcmp.eq.s32.totalorder %v255, 2
    %v261 = vxor.u32 %v251, 2147483648
    %v262 = vsel %vm260, %v261, %v252
    %v263 = vsel %vm256, %v259, %v262
    %v264 = vsel %vm253, nan, %v263
    %v265 = vld [vmem:[#allocation5] sm:$0xff]
    %v266 = vld [vmem:[#allocation7] sm:$0xff]
    %v268 = vlaneseq
    %v269 = vshrl.u32 %v268, 7
    %v270 = vsub.s32 0, %v269
    %v271 = vrot.slane %v160, %v270
    %v273 = vmul.f32 %v265, %v271
    %v275 = vlaneseq
    %v276 = vshrl.u32 %v275, 7
    %v277 = vsub.s32 0, %v276
    %v278 = vrot.slane %v264, %v277
    %v280 = vmul.f32 %v266, %v278
    %v281 = vsub.f32 %v273, %v280
    %vm282 = vcmask 130048
    %283 = vst.msk [vmem:[#allocation8] sm:$0xff] %vm282, %v281
    %v284 = vmul.f32 %v266, %v271
    %v285 = vmul.f32 %v265, %v278
    %v286 = vadd.f32 %v284, %v285
    %287 = vst.msk [vmem:[#allocation9] sm:$0xff] %vm282, %v286
    // Predicated region
    $region26: #{tpu_custom_call.1} parent=1 // pred_check
      _
    $region27: #{tpu_custom_call.1} parent=1 // pred_check_branch
      %289 = sbr.rel (0) target = $region29
    $region28: #{tpu_custom_call.1} parent=1 // pred_region
      %s291 = ssub.s32 128, 128
      %292 = vsyncadd [#allocation4], %s291
      %s294 = sshll.u32 [#allocation8], 4
      %s295 = int_to_ptr.vmem [resolvable:$true] %s294
      %297 = dma.vmem_to_hbm [thread:$0]  %s295, 128, %s3, [#allocation4]
    $region29: #{tpu_custom_call.1} parent=1 // pred_fallthru
      _
    // Predicated region
    $region30: #{tpu_custom_call.1} parent=1 // pred_check
      _
    $region31: #{tpu_custom_call.1} parent=1 // pred_check_branch
      %299 = sbr.rel (0) target = $region33
    $region32: #{tpu_custom_call.1} parent=1 // pred_region
      %s301 = ssub.s32 128, 128
      %302 = vsyncadd [#allocation10], %s301
      %s304 = sshll.u32 [#allocation9], 4
      %s305 = int_to_ptr.vmem [resolvable:$true] %s304
      %307 = dma.vmem_to_hbm [thread:$0]  %s305, 128, %s4, [#allocation10]
    $region33: #{tpu_custom_call.1} parent=1 // pred_fallthru
      _
    // Predicated region
    $region34: #{tpu_custom_call.1} parent=1 // pred_check
      _
    $region35: #{tpu_custom_call.1} parent=1 // pred_check_branch
      %309 = sbr.rel (0) target = $region37
    $region36: #{tpu_custom_call.1} parent=1 // pred_region
      %310 = dma.done [#allocation4], 128
    $region37: #{tpu_custom_call.1} parent=1 // pred_fallthru
      _
    // Predicated region
    $region38: #{tpu_custom_call.1} parent=1 // pred_check
      _
    $region39: #{tpu_custom_call.1} parent=1 // pred_check_branch
      %312 = sbr.rel (0) target = $region41
    $region40: #{tpu_custom_call.1} parent=1 // pred_region
      %313 = dma.done [#allocation10], 128
    $region41: #{tpu_custom_call.1} parent=1 // pred_fallthru
      _
    %314 = vsyncpa [#allocation3], 1
    %315 = vsyncpa [#allocation6], 1
    %316 = vsyncpa [#allocation4], 1
    %317 = vsyncpa [#allocation10], 1

</llo_original>
